<compile_context>
chip_gen: v7x
topology: tpu7x:2x2x1
jax: 0.10.0
libtpu: 0.0.40
codegen_flags: <defaults>
</compile_context>

<pallas_src>
import jax
import jax.numpy as jnp
from jax.experimental import pallas as pl
from jax.experimental.pallas import tpu as pltpu

LANE = 128


def _round_up(n, m=LANE):
    return ((n + m - 1) // m) * m


def _bottleneck_kernel(x_ref, xprev_ref, xnext_ref,
                       w1_ref, b1_ref, w3_ref, b3_ref,
                       w2_ref, b2_ref, wsc_ref, bsc_ref, o_ref):
    TL = x_ref.shape[0]

    t = pl.program_id(1)
    is_first = t == 0
    is_last = t == pl.num_programs(1) - 1

    x = x_ref[...]                                        # (TL, Cin) bf16 straight from HBM
    w1 = w1_ref[...]                                      # (Cin, C4p) bf16

    # --- conv1x1 (Cin -> C4) + folded BN + ReLU (f32 accumulation) ---------------------
    h1 = jnp.maximum(jnp.dot(x, w1, preferred_element_type=jnp.float32) + b1_ref[...], 0.0)

    # h1 for the two halo rows (row just before / just after this tile), computed with a
    # SINGLE merged (16, Cin) matmul; zero-masked only at true sequence ends (matching the
    # conv's zero padding), not at interior tile boundaries.
    xh = jnp.concatenate([xprev_ref[...], xnext_ref[...]], axis=0)       # (16, Cin) bf16
    h1h = jnp.maximum(jnp.dot(xh, w1, preferred_element_type=jnp.float32) + b1_ref[...], 0.0)
    h1_prev_row = jnp.where(is_first, 0.0, h1h[7:8, :])   # x[l0 - 1] row, (1, C4p)
    h1_next_row = jnp.where(is_last, 0.0, h1h[8:9, :])    # x[l0 + TL] row, (1, C4p)

    # --- conv k=3, pad=1 (C4 -> C4): three taps fused into ONE K=3*C4p matmul ----------
    row = jax.lax.broadcasted_iota(jnp.int32, h1.shape, 0)
    h_prev = jnp.where(row == 0, h1_prev_row, pltpu.roll(h1, shift=1, axis=0))            # h1[l-1]
    h_next = jnp.where(row == TL - 1, h1_next_row, pltpu.roll(h1, shift=TL - 1, axis=0))  # h1[l+1]
    h_cat = jnp.concatenate([h_prev, h1, h_next], axis=-1).astype(jnp.bfloat16)  # (TL, 3*C4p)
    h2 = jnp.maximum(jnp.dot(h_cat, w3_ref[...], preferred_element_type=jnp.float32)
                     + b3_ref[...], 0.0)                   # (TL, C4p) f32

    # --- conv1x1 (C4 -> Cout) + folded BN + ReLU (end of resid_block) ------------------
    resid = jnp.maximum(jnp.dot(h2.astype(jnp.bfloat16), w2_ref[...],
                                preferred_element_type=jnp.float32) + b2_ref[...], 0.0)

    # --- shortcut: conv1x1 (Cin -> Cout) + folded BN ------------------------------------
    sc = jnp.dot(x, wsc_ref[...], preferred_element_type=jnp.float32) + bsc_ref[...]

    # --- residual add + output ReLU; lane-dense (Coutp multiple of 128) bf16 store ------
    o_ref[...] = jnp.maximum(resid + sc, 0.0).astype(o_ref.dtype)


def bottleneck_forward_nlc(x_nlc, params, out_channels, *, tl=None):
    """x_nlc: (N, L, Cin) bfloat16 channels-last.  Returns (N, L, out_channels) bfloat16."""
    w1, b1, w3p, b3, w2, b2, wsc, bsc = params
    N, L, Cin = x_nlc.shape
    C4p = w1.shape[1]
    Coutp = w2.shape[1]
    assert w3p.shape == (3 * C4p, C4p)
    assert x_nlc.dtype == jnp.bfloat16

    if tl is None:
        tl = min(L, 512)                 # larger tile -> better HBM-roofline fraction
    assert L % 8 == 0 and tl % 8 == 0 and L % tl == 0, (L, tl)
    num_t = L // tl
    hb = tl // 8                          # L-tile measured in 8-row halo blocks
    n8 = L // 8                           # number of 8-row blocks along L

    flops = 2 * N * L * (Cin * C4p + 3 * C4p * C4p + C4p * Coutp + Cin * Coutp)
    bytes_accessed = int((N * L * Cin + 2 * N * num_t * 8 * Cin + N * L * Coutp) * 2   # bf16 acts
                         + 2 * (w1.size + w3p.size + w2.size + wsc.size)               # bf16 weights
                         + 4 * (b1.size + b3.size + b2.size + bsc.size))               # f32 biases

    out_padded = pl.pallas_call(
        _bottleneck_kernel,
        out_shape=jax.ShapeDtypeStruct((N, L, Coutp), jnp.bfloat16),
        grid_spec=pltpu.PrefetchScalarGridSpec(
            num_scalar_prefetch=0,
            grid=(N, num_t),
            in_specs=[
                # activation tile + two 8-row halo blocks (index clamped at sequence ends;
                # the kernel zero-masks those ends so the clamped block never matters)
                pl.BlockSpec((None, tl, Cin), lambda n, t: (n, t, 0)),
                pl.BlockSpec((None, 8, Cin),
                             lambda n, t: (n, jnp.maximum(t * hb - 1, 0), 0)),
                pl.BlockSpec((None, 8, Cin),
                             lambda n, t: (n, jnp.minimum((t + 1) * hb, n8 - 1), 0)),
                # weights / folded-BN biases: constant index_maps -> stay VMEM resident
                pl.BlockSpec((Cin, C4p),     lambda n, t: (0, 0)),   # w1  (bf16)
                pl.BlockSpec((1, C4p),       lambda n, t: (0, 0)),   # b1  (f32)
                pl.BlockSpec((3 * C4p, C4p), lambda n, t: (0, 0)),   # w3 packed taps (bf16)
                pl.BlockSpec((1, C4p),       lambda n, t: (0, 0)),   # b3
                pl.BlockSpec((C4p, Coutp),   lambda n, t: (0, 0)),   # w2  (bf16)
                pl.BlockSpec((1, Coutp),     lambda n, t: (0, 0)),   # b2
                pl.BlockSpec((Cin, Coutp),   lambda n, t: (0, 0)),   # wsc (bf16)
                pl.BlockSpec((1, Coutp),     lambda n, t: (0, 0)),   # bsc
            ],
            out_specs=pl.BlockSpec((None, tl, Coutp), lambda n, t: (n, t, 0)),
        ),
        compiler_params=pltpu.CompilerParams(
            dimension_semantics=("parallel", "parallel"),
            vmem_limit_bytes=48 * 1024 * 1024,   # <= v7x's 64 MiB physical; ample on v5e/v6e
        ),
        cost_estimate=pl.CostEstimate(
            flops=int(flops), transcendentals=0, bytes_accessed=bytes_accessed),
    )(x_nlc, x_nlc, x_nlc, w1, b1, w3p, b3, w2, b2, wsc, bsc)

    # Padded output lanes are exact zeros; this slice is a no-op when Cout % 128 == 0.
    return out_padded[..., :out_channels]


def bottleneck_forward_ncl(x_ncl, params, out_channels, *, tl=None):
    """Drop-in for the PyTorch (N, Cin, L) interface.  Prefer bottleneck_forward_nlc:
    these two transposes are exactly the extra HBM passes flagged by the perf review."""
    x_nlc = jnp.transpose(x_ncl, (0, 2, 1)).astype(jnp.bfloat16)
    out = bottleneck_forward_nlc(x_nlc, params, out_channels, tl=tl)
    return jnp.transpose(out, (0, 2, 1))


def make_params(key, in_channels, out_channels, kernel_size=3, eps=1e-5):
    """Parameters matching the PyTorch module's __init__ (BN folded, bf16 weights,
    C4/Cout zero-padded up to multiples of 128 lanes)."""
    c4 = out_channels // 4
    c4p = _round_up(c4)
    coutp = _round_up(out_channels)
    k1, k2, k3, k4 = jax.random.split(key, 4)

    # kaiming_normal_(mode='fan_out', nonlinearity='relu'): std = sqrt(2 / (Cout * K))
    def kaiming(k, cout, cin, ksz):
        std = (2.0 / (cout * ksz)) ** 0.5
        return jax.random.normal(k, (cout, cin, ksz), jnp.float32) * std

    w_conv1 = kaiming(k1, c4, in_channels, 1)             # (C4, Cin, 1)
    w_conv2 = kaiming(k2, c4, c4, kernel_size)            # (C4, C4, 3)
    w_conv3 = kaiming(k3, out_channels, c4, 1)            # (Cout, C4, 1)
    w_convs = kaiming(k4, out_channels, in_channels, 1)   # (Cout, Cin, 1)

    # BatchNorm (eval): gamma=1, beta=0, running_mean=0, running_var=1.
    def bn_fold(cout):
        gamma = jnp.ones((cout,), jnp.float32)
        beta = jnp.zeros((cout,), jnp.float32)
        mean = jnp.zeros((cout,), jnp.float32)
        var = jnp.ones((cout,), jnp.float32)
        scale = gamma / jnp.sqrt(var + eps)
        shift = beta - mean * scale
        return scale, shift

    s1, t1 = bn_fold(c4)
    s2, t2 = bn_fold(c4)
    s3, t3 = bn_fold(out_channels)
    ss, ts = bn_fold(out_channels)

    # Fold BN scale into conv weights; channels-last matmul form; zero-pad to lane multiples.
    w1 = jnp.pad((w_conv1[:, :, 0] * s1[:, None]).T, ((0, 0), (0, c4p - c4)))          # (Cin, C4p)
    w3_taps = [jnp.pad((w_conv2[:, :, t] * s2[:, None]).T,
                       ((0, c4p - c4), (0, c4p - c4))) for t in range(kernel_size)]
    w3p = jnp.concatenate(w3_taps, axis=0)                                              # (3*C4p, C4p)
    w2 = jnp.pad((w_conv3[:, :, 0] * s3[:, None]).T,
                 ((0, c4p - c4), (0, coutp - out_channels)))                            # (C4p, Coutp)
    wsc = jnp.pad((w_convs[:, :, 0] * ss[:, None]).T,
                  ((0, 0), (0, coutp - out_channels)))                                  # (Cin, Coutp)

    b1 = jnp.pad(t1.reshape(1, c4), ((0, 0), (0, c4p - c4)))
    b3 = jnp.pad(t2.reshape(1, c4), ((0, 0), (0, c4p - c4)))
    b2 = jnp.pad(t3.reshape(1, out_channels), ((0, 0), (0, coutp - out_channels)))
    bsc = jnp.pad(ts.reshape(1, out_channels), ((0, 0), (0, coutp - out_channels)))

    # bf16 weights for the MXU (accumulation is f32 in-kernel); biases stay f32.
    return (w1.astype(jnp.bfloat16), b1, w3p.astype(jnp.bfloat16), b3,
            w2.astype(jnp.bfloat16), b2, wsc.astype(jnp.bfloat16), bsc)


def reference_forward_nlc(x_nlc, params, out_channels):
    """Pure-JAX reference on the same bf16 operands with f32 accumulation (for validation)."""
    w1, b1, w3p, b3, w2, b2, wsc, bsc = params
    xf = x_nlc.astype(jnp.float32)
    h1 = jax.nn.relu(xf @ w1.astype(jnp.float32) + b1)
    h1 = h1.astype(jnp.bfloat16).astype(jnp.float32)       # match in-kernel bf16 MXU operand
    h1p = jnp.pad(h1, ((0, 0), (1, 1), (0, 0)))
    h_cat = jnp.concatenate([h1p[:, :-2], h1p[:, 1:-1], h1p[:, 2:]], axis=-1)
    h2 = jax.nn.relu(h_cat @ w3p.astype(jnp.float32) + b3)
    h2 = h2.astype(jnp.bfloat16).astype(jnp.float32)
    resid = jax.nn.relu(h2 @ w2.astype(jnp.float32) + b2)
    sc = xf @ wsc.astype(jnp.float32) + bsc
    out = jax.nn.relu(resid + sc)
    return out[..., :out_channels]


if __name__ == "__main__":
    N, Cin, Cout, L = 2, 8, 16, 32   # stride=1, in != out -> shortcut conv active

    key = jax.random.PRNGKey(0)
    kx, kp = jax.random.split(key)
    # Channels-last bf16 activations end-to-end: no NCL<->NLC wrapper transposes in the hot path.
    x_nlc = jax.random.normal(kx, (N, L, Cin), jnp.float32).astype(jnp.bfloat16)
    params = make_params(kp, Cin, Cout)

    # tl=16 -> 2 L-tiles per batch element, exercising the interior halo-stitch path;
    # grid = (2, 2) is even, so a v7x megacore shards it cleanly.
    out = jax.block_until_ready(bottleneck_forward_nlc(x_nlc, params, Cout, tl=16))
    assert out.shape == (N, L, Cout) and out.dtype == jnp.bfloat16, (out.shape, out.dtype)

    ref = reference_forward_nlc(x_nlc, params, Cout)
    err = float(jnp.max(jnp.abs(out.astype(jnp.float32) - ref)))
    # bf16 operands / bf16 output vs an f32-accumulated reference on the same bf16 values.
    assert jnp.allclose(out.astype(jnp.float32), ref, atol=3e-2, rtol=3e-2), \
        f"mismatch vs reference (max err {err})"
    print("KERNEL_OK")
</pallas_src>

<mosaic_0001>
module attributes {stable_mosaic.version = 11 : i64} {
  func.func @_bottleneck_kernel(%arg0: i32, %arg1: i32, %arg2: memref<1x16x8xbf16, #tpu.memory_space<vmem>>, %arg3: memref<1x8x8xbf16, #tpu.memory_space<vmem>>, %arg4: memref<1x8x8xbf16, #tpu.memory_space<vmem>>, %arg5: memref<8x128xbf16, #tpu.memory_space<vmem>>, %arg6: memref<1x128xf32, #tpu.memory_space<vmem>>, %arg7: memref<384x128xbf16, #tpu.memory_space<vmem>>, %arg8: memref<1x128xf32, #tpu.memory_space<vmem>>, %arg9: memref<128x128xbf16, #tpu.memory_space<vmem>>, %arg10: memref<1x128xf32, #tpu.memory_space<vmem>>, %arg11: memref<8x128xbf16, #tpu.memory_space<vmem>>, %arg12: memref<1x128xf32, #tpu.memory_space<vmem>>, %arg13: memref<1x16x128xbf16, #tpu.memory_space<vmem>>) attributes {dimension_semantics = [#tpu.dimension_semantics<parallel>, #tpu.dimension_semantics<parallel>], iteration_bounds = array<i64: 2, 2>, scalar_prefetch = 0 : i64, scratch_operands = 0 : i64, tpu.core_type = #tpu.core_type<tc>, window_params = [{transform_indices = @transform_0, window_bounds = array<i64: 1, 16, 8>}, {transform_indices = @transform_1, window_bounds = array<i64: 1, 8, 8>}, {transform_indices = @transform_2, window_bounds = array<i64: 1, 8, 8>}, {pipeline_mode = #tpu.pipeline_mode<synchronous>, transform_indices = @transform_3, window_bounds = array<i64: 8, 128>}, {pipeline_mode = #tpu.pipeline_mode<synchronous>, transform_indices = @transform_4, window_bounds = array<i64: 1, 128>}, {pipeline_mode = #tpu.pipeline_mode<synchronous>, transform_indices = @transform_5, window_bounds = array<i64: 384, 128>}, {pipeline_mode = #tpu.pipeline_mode<synchronous>, transform_indices = @transform_6, window_bounds = array<i64: 1, 128>}, {pipeline_mode = #tpu.pipeline_mode<synchronous>, transform_indices = @transform_7, window_bounds = array<i64: 128, 128>}, {pipeline_mode = #tpu.pipeline_mode<synchronous>, transform_indices = @transform_8, window_bounds = array<i64: 1, 128>}, {pipeline_mode = #tpu.pipeline_mode<synchronous>, transform_indices = @transform_9, window_bounds = array<i64: 8, 128>}, {pipeline_mode = #tpu.pipeline_mode<synchronous>, transform_indices = @transform_10, window_bounds = array<i64: 1, 128>}, {transform_indices = @transform_11, window_bounds = array<i64: 1, 16, 128>}]} {
    %c0_i32 = arith.constant 0 : i32
    %0 = arith.cmpi eq, %arg1, %c0_i32 : i32
    %c1_i32 = arith.constant 1 : i32
    %1 = arith.cmpi eq, %arg1, %c1_i32 : i32
    %c0 = arith.constant 0 : index
    %c0_0 = arith.constant 0 : index
    %c0_1 = arith.constant 0 : index
    %2 = vector.load %arg2[%c0, %c0_0, %c0_1] : memref<1x16x8xbf16, #tpu.memory_space<vmem>>, vector<1x16x8xbf16>
    %3 = vector.shape_cast %2 : vector<1x16x8xbf16> to vector<16x8xbf16>
    %c0_2 = arith.constant 0 : index
    %c0_3 = arith.constant 0 : index
    %4 = vector.load %arg5[%c0_2, %c0_3] : memref<8x128xbf16, #tpu.memory_space<vmem>>, vector<8x128xbf16>
    %cst = arith.constant dense<0.000000e+00> : vector<16x128xf32>
    %5 = tpu.matmul %3, %4, %cst {dimension_numbers = #tpu.dot_dimension_numbers<[1], [0], [0], [1], [0, 0, 1, 1], [], []>} : vector<16x8xbf16>, vector<8x128xbf16>, vector<16x128xf32> -> vector<16x128xf32>
    %c0_4 = arith.constant 0 : index
    %c0_5 = arith.constant 0 : index
    %6 = vector.load %arg6[%c0_4, %c0_5] : memref<1x128xf32, #tpu.memory_space<vmem>>, vector<1x128xf32>
    %7 = vector.broadcast %6 : vector<1x128xf32> to vector<16x128xf32>
    %8 = arith.addf %5, %7 : vector<16x128xf32>
    %cst_6 = arith.constant 0.000000e+00 : f32
    %9 = vector.broadcast %cst_6 : f32 to vector<16x128xf32>
    %10 = arith.maximumf %8, %9 : vector<16x128xf32>
    %c0_7 = arith.constant 0 : index
    %c0_8 = arith.constant 0 : index
    %c0_9 = arith.constant 0 : index
    %11 = vector.load %arg3[%c0_7, %c0_8, %c0_9] : memref<1x8x8xbf16, #tpu.memory_space<vmem>>, vector<1x8x8xbf16>
    %12 = vector.shape_cast %11 : vector<1x8x8xbf16> to vector<8x8xbf16>
    %c0_10 = arith.constant 0 : index
    %c0_11 = arith.constant 0 : index
    %c0_12 = arith.constant 0 : index
    %13 = vector.load %arg4[%c0_10, %c0_11, %c0_12] : memref<1x8x8xbf16, #tpu.memory_space<vmem>>, vector<1x8x8xbf16>
    %14 = vector.shape_cast %13 : vector<1x8x8xbf16> to vector<8x8xbf16>
    %15 = tpu.concatenate %12, %14 in 0 : vector<8x8xbf16>, vector<8x8xbf16> -> vector<16x8xbf16>
    %cst_13 = arith.constant dense<0.000000e+00> : vector<16x128xf32>
    %16 = tpu.matmul %15, %4, %cst_13 {dimension_numbers = #tpu.dot_dimension_numbers<[1], [0], [0], [1], [0, 0, 1, 1], [], []>} : vector<16x8xbf16>, vector<8x128xbf16>, vector<16x128xf32> -> vector<16x128xf32>
    %c0_14 = arith.constant 0 : index
    %c0_15 = arith.constant 0 : index
    %17 = vector.load %arg6[%c0_14, %c0_15] : memref<1x128xf32, #tpu.memory_space<vmem>>, vector<1x128xf32>
    %18 = vector.broadcast %17 : vector<1x128xf32> to vector<16x128xf32>
    %19 = arith.addf %16, %18 : vector<16x128xf32>
    %cst_16 = arith.constant 0.000000e+00 : f32
    %20 = vector.broadcast %cst_16 : f32 to vector<16x128xf32>
    %21 = arith.maximumf %19, %20 : vector<16x128xf32>
    %22 = vector.extract_strided_slice %21 {offsets = [7, 0], sizes = [1, 128], strides = [1, 1]} : vector<16x128xf32> to vector<1x128xf32>
    %cst_17 = arith.constant 0.000000e+00 : f32
    %23 = vector.broadcast %cst_17 : f32 to vector<1x128xf32>
    %24 = arith.select %0, %23, %22 : vector<1x128xf32>
    %25 = vector.extract_strided_slice %21 {offsets = [8, 0], sizes = [1, 128], strides = [1, 1]} : vector<16x128xf32> to vector<1x128xf32>
    %cst_18 = arith.constant 0.000000e+00 : f32
    %26 = vector.broadcast %cst_18 : f32 to vector<1x128xf32>
    %27 = arith.select %1, %26, %25 : vector<1x128xf32>
    %28 = tpu.iota {dimensions = array<i32: 0>} : vector<16x128xi32>
    %c0_i32_19 = arith.constant 0 : i32
    %29 = vector.broadcast %c0_i32_19 : i32 to vector<16x128xi32>
    %30 = arith.cmpi eq, %28, %29 : vector<16x128xi32>
    %c1_i32_20 = arith.constant 1 : i32
    %31 = tpu.dynamic_rotate %10 by %c1_i32_20 dim 0 : vector<16x128xf32>, i32 -> vector<16x128xf32>
    %32 = vector.shape_cast %24 : vector<1x128xf32> to vector<1x128xf32>
    %33 = vector.broadcast %32 : vector<1x128xf32> to vector<16x128xf32>
    %34 = arith.select %30, %33, %31 : vector<16x128xi1>, vector<16x128xf32>
    %c15_i32 = arith.constant 15 : i32
    %35 = vector.broadcast %c15_i32 : i32 to vector<16x128xi32>
    %36 = arith.cmpi eq, %28, %35 : vector<16x128xi32>
    %c15_i32_21 = arith.constant 15 : i32
    %37 = tpu.dynamic_rotate %10 by %c15_i32_21 dim 0 : vector<16x128xf32>, i32 -> vector<16x128xf32>
    %38 = vector.shape_cast %27 : vector<1x128xf32> to vector<1x128xf32>
    %39 = vector.broadcast %38 : vector<1x128xf32> to vector<16x128xf32>
    %40 = arith.select %36, %39, %37 : vector<16x128xi1>, vector<16x128xf32>
    %41 = tpu.concatenate %34, %10, %40 in 1 : vector<16x128xf32>, vector<16x128xf32>, vector<16x128xf32> -> vector<16x384xf32>
    %42 = arith.truncf %41 : vector<16x384xf32> to vector<16x384xbf16>
    %c0_22 = arith.constant 0 : index
    %c0_23 = arith.constant 0 : index
    %43 = vector.load %arg7[%c0_22, %c0_23] : memref<384x128xbf16, #tpu.memory_space<vmem>>, vector<384x128xbf16>
    %cst_24 = arith.constant dense<0.000000e+00> : vector<16x128xf32>
    %44 = tpu.matmul %42, %43, %cst_24 {dimension_numbers = #tpu.dot_dimension_numbers<[1], [0], [0], [1], [0, 0, 1, 1], [], []>} : vector<16x384xbf16>, vector<384x128xbf16>, vector<16x128xf32> -> vector<16x128xf32>
    %c0_25 = arith.constant 0 : index
    %c0_26 = arith.constant 0 : index
    %45 = vector.load %arg8[%c0_25, %c0_26] : memref<1x128xf32, #tpu.memory_space<vmem>>, vector<1x128xf32>
    %46 = vector.broadcast %45 : vector<1x128xf32> to vector<16x128xf32>
    %47 = arith.addf %44, %46 : vector<16x128xf32>
    %cst_27 = arith.constant 0.000000e+00 : f32
    %48 = vector.broadcast %cst_27 : f32 to vector<16x128xf32>
    %49 = arith.maximumf %47, %48 : vector<16x128xf32>
    %50 = arith.truncf %49 : vector<16x128xf32> to vector<16x128xbf16>
    %c0_28 = arith.constant 0 : index
    %c0_29 = arith.constant 0 : index
    %51 = vector.load %arg9[%c0_28, %c0_29] : memref<128x128xbf16, #tpu.memory_space<vmem>>, vector<128x128xbf16>
    %cst_30 = arith.constant dense<0.000000e+00> : vector<16x128xf32>
    %52 = tpu.matmul %50, %51, %cst_30 {dimension_numbers = #tpu.dot_dimension_numbers<[1], [0], [0], [1], [0, 0, 1, 1], [], []>} : vector<16x128xbf16>, vector<128x128xbf16>, vector<16x128xf32> -> vector<16x128xf32>
    %c0_31 = arith.constant 0 : index
    %c0_32 = arith.constant 0 : index
    %53 = vector.load %arg10[%c0_31, %c0_32] : memref<1x128xf32, #tpu.memory_space<vmem>>, vector<1x128xf32>
    %54 = vector.broadcast %53 : vector<1x128xf32> to vector<16x128xf32>
    %55 = arith.addf %52, %54 : vector<16x128xf32>
    %cst_33 = arith.constant 0.000000e+00 : f32
    %56 = vector.broadcast %cst_33 : f32 to vector<16x128xf32>
    %57 = arith.maximumf %55, %56 : vector<16x128xf32>
    %c0_34 = arith.constant 0 : index
    %c0_35 = arith.constant 0 : index
    %58 = vector.load %arg11[%c0_34, %c0_35] : memref<8x128xbf16, #tpu.memory_space<vmem>>, vector<8x128xbf16>
    %cst_36 = arith.constant dense<0.000000e+00> : vector<16x128xf32>
    %59 = tpu.matmul %3, %58, %cst_36 {dimension_numbers = #tpu.dot_dimension_numbers<[1], [0], [0], [1], [0, 0, 1, 1], [], []>} : vector<16x8xbf16>, vector<8x128xbf16>, vector<16x128xf32> -> vector<16x128xf32>
    %c0_37 = arith.constant 0 : index
    %c0_38 = arith.constant 0 : index
    %60 = vector.load %arg12[%c0_37, %c0_38] : memref<1x128xf32, #tpu.memory_space<vmem>>, vector<1x128xf32>
    %61 = vector.broadcast %60 : vector<1x128xf32> to vector<16x128xf32>
    %62 = arith.addf %59, %61 : vector<16x128xf32>
    %63 = arith.addf %57, %62 : vector<16x128xf32>
    %cst_39 = arith.constant 0.000000e+00 : f32
    %64 = vector.broadcast %cst_39 : f32 to vector<16x128xf32>
    %65 = arith.maximumf %63, %64 : vector<16x128xf32>
    %66 = arith.truncf %65 : vector<16x128xf32> to vector<16x128xbf16>
    %c0_40 = arith.constant 0 : index
    %c0_41 = arith.constant 0 : index
    %c0_42 = arith.constant 0 : index
    %67 = vector.load %arg13[%c0_40, %c0_41, %c0_42] : memref<1x16x128xbf16, #tpu.memory_space<vmem>>, vector<1x16x128xbf16>
    %68 = vector.shape_cast %67 : vector<1x16x128xbf16> to vector<16x128xbf16>
    %69 = vector.shape_cast %66 : vector<16x128xbf16> to vector<1x16x128xbf16>
    tpu.vector_store %arg13[%c0_40, %c0_41, %c0_42], %69 {strides = array<i32>} : memref<1x16x128xbf16, #tpu.memory_space<vmem>>, vector<1x16x128xbf16>,
    return
  }
  func.func @transform_0(%arg0: i32, %arg1: i32) -> (i32, i32, i32) {
    %c0_i32 = arith.constant 0 : i32
    %c0_i32_0 = arith.constant 0 : i32
    return %arg0, %arg1, %c0_i32 : i32, i32, i32
  }
  func.func @transform_1(%arg0: i32, %arg1: i32) -> (i32, i32, i32) {
    %c2_i32 = arith.constant 2 : i32
    %0 = arith.muli %arg1, %c2_i32 : i32
    %c1_i32 = arith.constant 1 : i32
    %1 = arith.subi %0, %c1_i32 : i32
    %c0_i32 = arith.constant 0 : i32
    %2 = arith.maxsi %1, %c0_i32 : i32
    %c0_i32_0 = arith.constant 0 : i32
    %c0_i32_1 = arith.constant 0 : i32
    return %arg0, %2, %c0_i32_0 : i32, i32, i32
  }
  func.func @transform_2(%arg0: i32, %arg1: i32) -> (i32, i32, i32) {
    %c1_i32 = arith.constant 1 : i32
    %0 = arith.addi %arg1, %c1_i32 : i32
    %c2_i32 = arith.constant 2 : i32
    %1 = arith.muli %0, %c2_i32 : i32
    %c3_i32 = arith.constant 3 : i32
    %2 = arith.minsi %1, %c3_i32 : i32
    %c0_i32 = arith.constant 0 : i32
    %c0_i32_0 = arith.constant 0 : i32
    return %arg0, %2, %c0_i32 : i32, i32, i32
  }
  func.func @transform_3(%arg0: i32, %arg1: i32) -> (i32, i32) {
    %c0_i32 = arith.constant 0 : i32
    %c0_i32_0 = arith.constant 0 : i32
    %c0_i32_1 = arith.constant 0 : i32
    return %c0_i32, %c0_i32_0 : i32, i32
  }
  func.func @transform_4(%arg0: i32, %arg1: i32) -> (i32, i32) {
    %c0_i32 = arith.constant 0 : i32
    %c0_i32_0 = arith.constant 0 : i32
    %c0_i32_1 = arith.constant 0 : i32
    return %c0_i32, %c0_i32_0 : i32, i32
  }
  func.func @transform_5(%arg0: i32, %arg1: i32) -> (i32, i32) {
    %c0_i32 = arith.constant 0 : i32
    %c0_i32_0 = arith.constant 0 : i32
    %c0_i32_1 = arith.constant 0 : i32
    return %c0_i32, %c0_i32_0 : i32, i32
  }
  func.func @transform_6(%arg0: i32, %arg1: i32) -> (i32, i32) {
    %c0_i32 = arith.constant 0 : i32
    %c0_i32_0 = arith.constant 0 : i32
    %c0_i32_1 = arith.constant 0 : i32
    return %c0_i32, %c0_i32_0 : i32, i32
  }
  func.func @transform_7(%arg0: i32, %arg1: i32) -> (i32, i32) {
    %c0_i32 = arith.constant 0 : i32
    %c0_i32_0 = arith.constant 0 : i32
    %c0_i32_1 = arith.constant 0 : i32
    return %c0_i32, %c0_i32_0 : i32, i32
  }
  func.func @transform_8(%arg0: i32, %arg1: i32) -> (i32, i32) {
    %c0_i32 = arith.constant 0 : i32
    %c0_i32_0 = arith.constant 0 : i32
    %c0_i32_1 = arith.constant 0 : i32
    return %c0_i32, %c0_i32_0 : i32, i32
  }
  func.func @transform_9(%arg0: i32, %arg1: i32) -> (i32, i32) {
    %c0_i32 = arith.constant 0 : i32
    %c0_i32_0 = arith.constant 0 : i32
    %c0_i32_1 = arith.constant 0 : i32
    return %c0_i32, %c0_i32_0 : i32, i32
  }
  func.func @transform_10(%arg0: i32, %arg1: i32) -> (i32, i32) {
    %c0_i32 = arith.constant 0 : i32
    %c0_i32_0 = arith.constant 0 : i32
    %c0_i32_1 = arith.constant 0 : i32
    return %c0_i32, %c0_i32_0 : i32, i32
  }
  func.func @transform_11(%arg0: i32, %arg1: i32) -> (i32, i32, i32) {
    %c0_i32 = arith.constant 0 : i32
    %c0_i32_0 = arith.constant 0 : i32
    return %arg0, %arg1, %c0_i32 : i32, i32, i32
  }
}

</mosaic_0001>

<llo_original>
// kernel: tpu_custom_call.1
$region0: #{tpu_custom_call.1}
  #allocation0 [shape = 'u32[]', space=smem, size = 0x4, offset = 0x4, fixed_abs, tag = 'smem constant byte address 0x4 - core index']
  #allocation1 [shape = 'u32[144,128]{1,0:T(1,128)}', space=vmem, size = 0x12000, scoped, tag = 'internal scratch']
  %s0 = inlined_call_operand.vmem [shape: bf16[2,32,8], index: 0, kind: input, shape index: {}]
  %s1 = inlined_call_operand.vmem [shape: bf16[2,32,8], index: 1, kind: input, shape index: {}]
  %s2 = inlined_call_operand.vmem [shape: bf16[2,32,8], index: 2, kind: input, shape index: {}]
  %s3 = inlined_call_operand.vmem [shape: bf16[8,128], index: 3, kind: input, shape index: {}]
  %s4 = inlined_call_operand.vmem [shape: f32[1,128], index: 4, kind: input, shape index: {}]
  %s5 = inlined_call_operand.hbm [shape: bf16[384,128], index: 5, kind: input, shape index: {}]
  %s6 = inlined_call_operand.vmem [shape: f32[1,128], index: 6, kind: input, shape index: {}]
  %s7 = inlined_call_operand.vmem [shape: bf16[128,128], index: 7, kind: input, shape index: {}]
  %s8 = inlined_call_operand.vmem [shape: f32[1,128], index: 8, kind: input, shape index: {}]
  %s9 = inlined_call_operand.vmem [shape: bf16[8,128], index: 9, kind: input, shape index: {}]
  %s10 = inlined_call_operand.vmem [shape: f32[1,128], index: 10, kind: input, shape index: {}]
  %s11 = inlined_call_operand.hbm [shape: bf16[2,32,128], index: 11, kind: output, shape index: {}]
  %s12 = sld [smem:[#allocation0]]
  $region81: #{tpu_custom_call.1} parent=0
    _
  %s14 = ssub.s32 1, %s12
  %s15 = scalar_select 0, %s14, %s12
  $region1: #{tpu_custom_call.1} parent=0
    #allocation2 [shape = 'u8[98304]{0}', space=vmem, size = 0x18000, scoped, tag = 'input window, operand 5, single buffered']
    #allocation3 [shape = 's32[2]{0}', space=sflag, size = 0x8, scoped, tag = 'scoped memory for tpu_custom_call.1']
    #allocation4 [shape = 's32[2]{0}', space=sflag, size = 0x8, scoped, tag = 'scoped memory for tpu_custom_call.1']
    #allocation5 [shape = 'u8[8192]{0}', space=vmem, size = 0x2000, scoped, tag = 'output window, operand 0']
    %16 = vsyncpa [#allocation3], 0
    %17 = vsyncpa [#allocation4], 0
    %s18 = scalar_lea.sflag [#allocation4], 1
    %19 = vsyncpa %s18, 0
    loop: start=0, step=1, limit=6
    $region2: #{tpu_custom_call.1} parent=1 // loop_pre_header
      _
    $region3: #{tpu_custom_call.1} parent=1 // loop_header
      %s21 = sphi 0, %s25
      %p22 = scmp.ge.s32.totalorder %s21, 6
      %s28 = sphi 0, %s40
      %s29 = sphi 0, %s36
      %s30 = sphi 0, %s28
      %s31 = sphi 0, %s29
      %s32 = sphi 0, %s30
      %s33 = sphi 0, %s31
      %s45 = sphi 0, %s47
      %s48 = sphi 0, %s45
      %s49 = sphi 0, %s48
      %s65 = sphi 0, %s49
      %s81 = sphi 0, %s83
      %s84 = sphi 0, %s81
      %s85 = sphi 0, %s84
      %s101 = sphi 0, %s85
      %s117 = sphi 0, %s119
      %s120 = sphi 0, %s117
      %s121 = sphi 0, %s120
      %s137 = sphi 0, %s121
      %s141 = sphi 0, %s141
      %s143 = sphi 0, %s141
      %s144 = sphi 0, %s143
      %s158 = sphi 0, %s144
      %s162 = sphi 0, %s162
      %s164 = sphi 0, %s162
      %s165 = sphi 0, %s164
      %s179 = sphi 0, %s165
      %s183 = sphi 0, %s183
      %s185 = sphi 0, %s183
      %s186 = sphi 0, %s185
      %s200 = sphi 0, %s186
      %s204 = sphi 0, %s204
      %s206 = sphi 0, %s204
      %s207 = sphi 0, %s206
      %s221 = sphi 0, %s207
      %s225 = sphi 0, %s225
      %s227 = sphi 0, %s225
      %s228 = sphi 0, %s227
      %s242 = sphi 0, %s228
      %s246 = sphi 0, %s246
      %s248 = sphi 0, %s246
      %s249 = sphi 0, %s248
      %s263 = sphi 0, %s249
      %s267 = sphi 0, %s267
      %s269 = sphi 0, %s267
      %s270 = sphi 0, %s269
      %s284 = sphi 0, %s270
      %s288 = sphi 0, %s288
      %s290 = sphi 0, %s288
      %s291 = sphi 0, %s290
      %s305 = sphi 0, %s291
      %s313 = sphi 0, %s315
      %s316 = sphi 0, %s313
      %s317 = sphi 0, %s316
      %s333 = sphi 0, %s317
    $region4: #{tpu_custom_call.1} parent=1 // loop_header_branch
      %24 = sbr.rel (%p22) target = $region8
    $region5: #{tpu_custom_call.1} parent=1 // loop_body
      %s26 = ssub.s32 %s21, 1
      %s27 = ssub.s32 %s21, 2
      %s34 = sadd.s32 1, %s29
      %p35 = scmp.ge.s32.totalorder %s34, 2
      %s36 = scalar_select %p35, 0, %s34
      %s37 = sadd.s32 1, %s28
      %s38 = scalar_select %p35, %s37, %s28
      %p39 = scmp.ge.s32.totalorder %s38, 2
      %s40 = scalar_select %p39, 0, %s38
      %s41 = ssub.s32 %s28, %s40
      %s42 = ssub.s32 %s29, %s36
      %s43 = sor.u32 %s41, %s42
      %p44 = scmp.eq.s32.totalorder %s43, 0
      %s46 = sadd.s32 %s45, 1
      %s47 = scalar_select %p44, %s45, %s46
      %p50 = pneg %p44
      %p51 = scmp.eq.s32.totalorder %s21, 3
      %p52 = por %p50, %p51
      %p53 = scmp.ne.s32.totalorder %s45, %s48
      %p54 = scmp.eq.s32.totalorder %s21, 0
      %p55 = por %p53, %p54
      %p56 = scmp.ne.s32.totalorder %s45, %s48
      %p57 = scmp.eq.s32.totalorder %s26, 3
      %p58 = por %p56, %p57
      %p59 = scmp.ne.s32.totalorder %s48, %s49
      %p60 = scmp.eq.s32.totalorder %s26, 0
      %p61 = por %p59, %p60
      %p62 = scmp.ne.s32.totalorder %s48, %s49
      %p63 = scmp.eq.s32.totalorder %s27, 3
      %p64 = por %p62, %p63
      %p66 = scmp.ne.s32.totalorder %s49, %s65
      %p67 = scmp.eq.s32.totalorder %s27, 0
      %p68 = por %p66, %p67
      %s69 = smul.u32 %s29, 2
      %s70 = ssub.s32 %s69, 1
      %p71 = scmp.gt.s32.totalorder %s70, 0
      %s72 = scalar_select %p71, %s70, 0
      %s73 = smul.u32 %s36, 2
      %s74 = ssub.s32 %s73, 1
      %p75 = scmp.gt.s32.totalorder %s74, 0
      %s76 = scalar_select %p75, %s74, 0
      %s77 = ssub.s32 %s28, %s40
      %s78 = ssub.s32 %s72, %s76
      %s79 = sor.u32 %s77, %s78
      %p80 = scmp.eq.s32.totalorder %s79, 0
      %s82 = sadd.s32 %s81, 1
      %s83 = scalar_select %p80, %s81, %s82
      %p86 = pneg %p80
      %p87 = scmp.eq.s32.totalorder %s21, 3
      %p88 = por %p86, %p87
      %p89 = scmp.ne.s32.totalorder %s81, %s84
      %p90 = scmp.eq.s32.totalorder %s21, 0
      %p91 = por %p89, %p90
      %p92 = scmp.ne.s32.totalorder %s81, %s84
      %p93 = scmp.eq.s32.totalorder %s26, 3
      %p94 = por %p92, %p93
      %p95 = scmp.ne.s32.totalorder %s84, %s85
      %p96 = scmp.eq.s32.totalorder %s26, 0
      %p97 = por %p95, %p96
      %p98 = scmp.ne.s32.totalorder %s84, %s85
      %p99 = scmp.eq.s32.totalorder %s27, 3
      %p100 = por %p98, %p99
      %p102 = scmp.ne.s32.totalorder %s85, %s101
      %p103 = scmp.eq.s32.totalorder %s27, 0
      %p104 = por %p102, %p103
      %s105 = sadd.s32 %s29, 1
      %s106 = smul.u32 %s105, 2
      %p107 = scmp.lt.s32.totalorder %s106, 3
      %s108 = scalar_select %p107, %s106, 3
      %s109 = sadd.s32 %s36, 1
      %s110 = smul.u32 %s109, 2
      %p111 = scmp.lt.s32.totalorder %s110, 3
      %s112 = scalar_select %p111, %s110, 3
      %s113 = ssub.s32 %s28, %s40
      %s114 = ssub.s32 %s108, %s112
      %s115 = sor.u32 %s113, %s114
      %p116 = scmp.eq.s32.totalorder %s115, 0
      %s118 = sadd.s32 %s117, 1
      %s119 = scalar_select %p116, %s117, %s118
      %p122 = pneg %p116
      %p123 = scmp.eq.s32.totalorder %s21, 3
      %p124 = por %p122, %p123
      %p125 = scmp.ne.s32.totalorder %s117, %s120
      %p126 = scmp.eq.s32.totalorder %s21, 0
      %p127 = por %p125, %p126
      %p128 = scmp.ne.s32.totalorder %s117, %s120
      %p129 = scmp.eq.s32.totalorder %s26, 3
      %p130 = por %p128, %p129
      %p131 = scmp.ne.s32.totalorder %s120, %s121
      %p132 = scmp.eq.s32.totalorder %s26, 0
      %p133 = por %p131, %p132
      %p134 = scmp.ne.s32.totalorder %s120, %s121
      %p135 = scmp.eq.s32.totalorder %s27, 3
      %p136 = por %p134, %p135
      %p138 = scmp.ne.s32.totalorder %s121, %s137
      %p139 = scmp.eq.s32.totalorder %s27, 0
      %p140 = por %p138, %p139
      %s142 = sadd.s32 %s141, 1
      %p145 = scmp.eq.s32.totalorder %s21, 3
      %p146 = scmp.ne.s32.totalorder %s141, %s143
      %p147 = scmp.eq.s32.totalorder %s21, 0
      %p148 = por %p146, %p147
      %p149 = scmp.ne.s32.totalorder %s141, %s143
      %p150 = scmp.eq.s32.totalorder %s26, 3
      %p151 = por %p149, %p150
      %p152 = scmp.ne.s32.totalorder %s143, %s144
      %p153 = scmp.eq.s32.totalorder %s26, 0
      %p154 = por %p152, %p153
      %p155 = scmp.ne.s32.totalorder %s143, %s144
      %p156 = scmp.eq.s32.totalorder %s27, 3
      %p157 = por %p155, %p156
      %p159 = scmp.ne.s32.totalorder %s144, %s158
      %p160 = scmp.eq.s32.totalorder %s27, 0
      %p161 = por %p159, %p160
      %s163 = sadd.s32 %s162, 1
      %p166 = scmp.eq.s32.totalorder %s21, 3
      %p167 = scmp.ne.s32.totalorder %s162, %s164
      %p168 = scmp.eq.s32.totalorder %s21, 0
      %p169 = por %p167, %p168
      %p170 = scmp.ne.s32.totalorder %s162, %s164
      %p171 = scmp.eq.s32.totalorder %s26, 3
      %p172 = por %p170, %p171
      %p173 = scmp.ne.s32.totalorder %s164, %s165
      %p174 = scmp.eq.s32.totalorder %s26, 0
      %p175 = por %p173, %p174
      %p176 = scmp.ne.s32.totalorder %s164, %s165
      %p177 = scmp.eq.s32.totalorder %s27, 3
      %p178 = por %p176, %p177
      %p180 = scmp.ne.s32.totalorder %s165, %s179
      %p181 = scmp.eq.s32.totalorder %s27, 0
      %p182 = por %p180, %p181
      %s184 = sadd.s32 %s183, 1
      %p187 = scmp.eq.s32.totalorder %s21, 3
      %p188 = scmp.ne.s32.totalorder %s183, %s185
      %p189 = scmp.eq.s32.totalorder %s21, 0
      %p190 = por %p188, %p189
      %p191 = scmp.ne.s32.totalorder %s183, %s185
      %p192 = scmp.eq.s32.totalorder %s26, 3
      %p193 = por %p191, %p192
      %p194 = scmp.ne.s32.totalorder %s185, %s186
      %p195 = scmp.eq.s32.totalorder %s26, 0
      %p196 = por %p194, %p195
      %p197 = scmp.ne.s32.totalorder %s185, %s186
      %p198 = scmp.eq.s32.totalorder %s27, 3
      %p199 = por %p197, %p198
      %p201 = scmp.ne.s32.totalorder %s186, %s200
      %p202 = scmp.eq.s32.totalorder %s27, 0
      %p203 = por %p201, %p202
      %s205 = sadd.s32 %s204, 1
      %p208 = scmp.eq.s32.totalorder %s21, 3
      %p209 = scmp.ne.s32.totalorder %s204, %s206
      %p210 = scmp.eq.s32.totalorder %s21, 0
      %p211 = por %p209, %p210
      %p212 = scmp.ne.s32.totalorder %s204, %s206
      %p213 = scmp.eq.s32.totalorder %s26, 3
      %p214 = por %p212, %p213
      %p215 = scmp.ne.s32.totalorder %s206, %s207
      %p216 = scmp.eq.s32.totalorder %s26, 0
      %p217 = por %p215, %p216
      %p218 = scmp.ne.s32.totalorder %s206, %s207
      %p219 = scmp.eq.s32.totalorder %s27, 3
      %p220 = por %p218, %p219
      %p222 = scmp.ne.s32.totalorder %s207, %s221
      %p223 = scmp.eq.s32.totalorder %s27, 0
      %p224 = por %p222, %p223
      %s226 = sadd.s32 %s225, 1
      %p229 = scmp.eq.s32.totalorder %s21, 3
      %p230 = scmp.ne.s32.totalorder %s225, %s227
      %p231 = scmp.eq.s32.totalorder %s21, 0
      %p232 = por %p230, %p231
      %p233 = scmp.ne.s32.totalorder %s225, %s227
      %p234 = scmp.eq.s32.totalorder %s26, 3
      %p235 = por %p233, %p234
      %p236 = scmp.ne.s32.totalorder %s227, %s228
      %p237 = scmp.eq.s32.totalorder %s26, 0
      %p238 = por %p236, %p237
      %p239 = scmp.ne.s32.totalorder %s227, %s228
      %p240 = scmp.eq.s32.totalorder %s27, 3
      %p241 = por %p239, %p240
      %p243 = scmp.ne.s32.totalorder %s228, %s242
      %p244 = scmp.eq.s32.totalorder %s27, 0
      %p245 = por %p243, %p244
      %s247 = sadd.s32 %s246, 1
      %p250 = scmp.eq.s32.totalorder %s21, 3
      %p251 = scmp.ne.s32.totalorder %s246, %s248
      %p252 = scmp.eq.s32.totalorder %s21, 0
      %p253 = por %p251, %p252
      %p254 = scmp.ne.s32.totalorder %s246, %s248
      %p255 = scmp.eq.s32.totalorder %s26, 3
      %p256 = por %p254, %p255
      %p257 = scmp.ne.s32.totalorder %s248, %s249
      %p258 = scmp.eq.s32.totalorder %s26, 0
      %p259 = por %p257, %p258
      %p260 = scmp.ne.s32.totalorder %s248, %s249
      %p261 = scmp.eq.s32.totalorder %s27, 3
      %p262 = por %p260, %p261
      %p264 = scmp.ne.s32.totalorder %s249, %s263
      %p265 = scmp.eq.s32.totalorder %s27, 0
      %p266 = por %p264, %p265
      %s268 = sadd.s32 %s267, 1
      %p271 = scmp.eq.s32.totalorder %s21, 3
      %p272 = scmp.ne.s32.totalorder %s267, %s269
      %p273 = scmp.eq.s32.totalorder %s21, 0
      %p274 = por %p272, %p273
      %p275 = scmp.ne.s32.totalorder %s267, %s269
      %p276 = scmp.eq.s32.totalorder %s26, 3
      %p277 = por %p275, %p276
      %p278 = scmp.ne.s32.totalorder %s269, %s270
      %p279 = scmp.eq.s32.totalorder %s26, 0
      %p280 = por %p278, %p279
      %p281 = scmp.ne.s32.totalorder %s269, %s270
      %p282 = scmp.eq.s32.totalorder %s27, 3
      %p283 = por %p281, %p282
      %p285 = scmp.ne.s32.totalorder %s270, %s284
      %p286 = scmp.eq.s32.totalorder %s27, 0
      %p287 = por %p285, %p286
      %s289 = sadd.s32 %s288, 1
      %p292 = scmp.eq.s32.totalorder %s21, 3
      %p293 = scmp.ne.s32.totalorder %s288, %s290
      %p294 = scmp.eq.s32.totalorder %s21, 0
      %p295 = por %p293, %p294
      %p296 = scmp.ne.s32.totalorder %s288, %s290
      %p297 = scmp.eq.s32.totalorder %s26, 3
      %p298 = por %p296, %p297
      %p299 = scmp.ne.s32.totalorder %s290, %s291
      %p300 = scmp.eq.s32.totalorder %s26, 0
      %p301 = por %p299, %p300
      %p302 = scmp.ne.s32.totalorder %s290, %s291
      %p303 = scmp.eq.s32.totalorder %s27, 3
      %p304 = por %p302, %p303
      %p306 = scmp.ne.s32.totalorder %s291, %s305
      %p307 = scmp.eq.s32.totalorder %s27, 0
      %p308 = por %p306, %p307
      %s309 = ssub.s32 %s28, %s40
      %s310 = ssub.s32 %s29, %s36
      %s311 = sor.u32 %s309, %s310
      %p312 = scmp.eq.s32.totalorder %s311, 0
      %s314 = sadd.s32 %s313, 1
      %s315 = scalar_select %p312, %s313, %s314
      %p318 = pneg %p312
      %p319 = scmp.eq.s32.totalorder %s21, 3
      %p320 = por %p318, %p319
      %p321 = scmp.ne.s32.totalorder %s313, %s316
      %p322 = scmp.eq.s32.totalorder %s21, 0
      %p323 = por %p321, %p322
      %p324 = scmp.ne.s32.totalorder %s313, %s316
      %p325 = scmp.eq.s32.totalorder %s26, 3
      %p326 = por %p324, %p325
      %p327 = scmp.ne.s32.totalorder %s316, %s317
      %p328 = scmp.eq.s32.totalorder %s26, 0
      %p329 = por %p327, %p328
      %p330 = scmp.ne.s32.totalorder %s316, %s317
      %p331 = scmp.eq.s32.totalorder %s27, 3
      %p332 = por %p330, %p331
      %p334 = scmp.ne.s32.totalorder %s317, %s333
      %p335 = scmp.eq.s32.totalorder %s27, 0
      %p336 = por %p334, %p335
      %p337 = scmp.le.s32.totalorder 1, %s21
      %p338 = scmp.lt.s32.totalorder %s21, 5
      %p339 = pnand %p337, %p338
      %p340 = pneg %p339
      // Predicated region
      $region9: #{tpu_custom_call.1} parent=5 // pred_check
        _
      $region10: #{tpu_custom_call.1} parent=5 // pred_check_branch
        %342 = sbr.rel (%p339) target = $region12
      $region11: #{tpu_custom_call.1} parent=5 // pred_region
        %s343 = ssub.s32 %s21, 1
        // Predicated region
        $region13: #{tpu_custom_call.1} parent=11 // pred_check
          %p344 = pneg %p154
        $region14: #{tpu_custom_call.1} parent=11 // pred_check_branch
          %346 = sbr.rel (%p344) target = $region16
        $region15: #{tpu_custom_call.1} parent=11 // pred_region
          _
        $region16: #{tpu_custom_call.1} parent=11 // pred_fallthru
          _
        // Predicated region
        $region17: #{tpu_custom_call.1} parent=11 // pred_check
          %p347 = pneg %p175
        $region18: #{tpu_custom_call.1} parent=11 // pred_check_branch
          %349 = sbr.rel (%p347) target = $region20
        $region19: #{tpu_custom_call.1} parent=11 // pred_region
          _
        $region20: #{tpu_custom_call.1} parent=11 // pred_fallthru
          _
        // Predicated region
        $region21: #{tpu_custom_call.1} parent=11 // pred_check
          %p350 = pneg %p196
        $region22: #{tpu_custom_call.1} parent=11 // pred_check_branch
          %352 = sbr.rel (%p350) target = $region24
        $region23: #{tpu_custom_call.1} parent=11 // pred_region
          %s354 = ssub.s32 3072, 3072
          %355 = vsyncadd [#allocation3], %s354
          %s356 = sshll.u32 [#allocation2], 4
          %s357 = int_to_ptr.vmem [resolvable:$true] %s356
          %362 = dma.hbm_to_vmem [thread:$0]  %s5, 3072, %s357, [#allocation3], 64, 64, 4
        $region24: #{tpu_custom_call.1} parent=11 // pred_fallthru
          _
        // Predicated region
        $region25: #{tpu_custom_call.1} parent=11 // pred_check
          %p363 = pneg %p217
        $region26: #{tpu_custom_call.1} parent=11 // pred_check_branch
          %365 = sbr.rel (%p363) target = $region28
        $region27: #{tpu_custom_call.1} parent=11 // pred_region
          _
        $region28: #{tpu_custom_call.1} parent=11 // pred_fallthru
          _
        // Predicated region
        $region29: #{tpu_custom_call.1} parent=11 // pred_check
          %p366 = pneg %p238
        $region30: #{tpu_custom_call.1} parent=11 // pred_check_branch
          %368 = sbr.rel (%p366) target = $region32
        $region31: #{tpu_custom_call.1} parent=11 // pred_region
          _
        $region32: #{tpu_custom_call.1} parent=11 // pred_fallthru
          _
        // Predicated region
        $region33: #{tpu_custom_call.1} parent=11 // pred_check
          %p369 = pneg %p259
        $region34: #{tpu_custom_call.1} parent=11 // pred_check_branch
          %371 = sbr.rel (%p369) target = $region36
        $region35: #{tpu_custom_call.1} parent=11 // pred_region
          _
        $region36: #{tpu_custom_call.1} parent=11 // pred_fallthru
          _
        // Predicated region
        $region37: #{tpu_custom_call.1} parent=11 // pred_check
          %p372 = pneg %p280
        $region38: #{tpu_custom_call.1} parent=11 // pred_check_branch
          %374 = sbr.rel (%p372) target = $region40
        $region39: #{tpu_custom_call.1} parent=11 // pred_region
          _
        $region40: #{tpu_custom_call.1} parent=11 // pred_fallthru
          _
        // Predicated region
        $region41: #{tpu_custom_call.1} parent=11 // pred_check
          %p375 = pneg %p301
        $region42: #{tpu_custom_call.1} parent=11 // pred_check_branch
          %377 = sbr.rel (%p375) target = $region44
        $region43: #{tpu_custom_call.1} parent=11 // pred_region
          _
        $region44: #{tpu_custom_call.1} parent=11 // pred_fallthru
          _
      $region12: #{tpu_custom_call.1} parent=5 // pred_fallthru
        _
      %p378 = scmp.lt.s32.totalorder %s21, 4
      // Predicated region
      $region45: #{tpu_custom_call.1} parent=5 // pred_check
        %p379 = pneg %p378
      $region46: #{tpu_custom_call.1} parent=5 // pred_check_branch
        %381 = sbr.rel (%p379) target = $region48
      $region47: #{tpu_custom_call.1} parent=5 // pred_region
        // Predicated region
        $region49: #{tpu_custom_call.1} parent=47 // pred_check
          %p382 = pneg %p55
        $region50: #{tpu_custom_call.1} parent=47 // pred_check_branch
          %384 = sbr.rel (%p382) target = $region52
        $region51: #{tpu_custom_call.1} parent=47 // pred_region
          %s385 = smul.u32 2, %s29
          %p386 = scmp.lt.s32.totalorder %s28, 1
          %s387 = scalar_select %p386, %s28, 1
          %p388 = scmp.lt.s32.totalorder %s385, 3
          %s389 = scalar_select %p388, %s385, 3
          %s390 = smul.addr %s387, 4
          %s391 = sadd.s32 %s389, %s390
          %s392 = smul.addr %s391, 4
          %s393 = scalar_lea.vmem %s0, %s392
          %s394 = smul.u32 2, %s29
        $region52: #{tpu_custom_call.1} parent=47 // pred_fallthru
          _
        // Predicated region
        $region53: #{tpu_custom_call.1} parent=47 // pred_check
          %p395 = pneg %p91
        $region54: #{tpu_custom_call.1} parent=47 // pred_check_branch
          %397 = sbr.rel (%p395) target = $region56
        $region55: #{tpu_custom_call.1} parent=47 // pred_region
          %s398 = smul.u32 %s29, 2
          %s399 = ssub.s32 %s398, 1
          %p400 = scmp.gt.s32.totalorder %s399, 0
          %s401 = scalar_select %p400, %s399, 0
          %p402 = scmp.lt.s32.totalorder %s28, 1
          %s403 = scalar_select %p402, %s28, 1
          %p404 = scmp.lt.s32.totalorder %s401, 3
          %s405 = scalar_select %p404, %s401, 3
          %s406 = smul.addr %s403, 4
          %s407 = sadd.s32 %s405, %s406
          %s408 = smul.addr %s407, 4
          %s409 = scalar_lea.vmem %s1, %s408
          %s410 = smul.u32 %s29, 2
          %s411 = ssub.s32 %s410, 1
          %p412 = scmp.gt.s32.totalorder %s411, 0
          %s413 = scalar_select %p412, %s411, 0
        $region56: #{tpu_custom_call.1} parent=47 // pred_fallthru
          _
        // Predicated region
        $region57: #{tpu_custom_call.1} parent=47 // pred_check
          %p414 = pneg %p127
        $region58: #{tpu_custom_call.1} parent=47 // pred_check_branch
          %416 = sbr.rel (%p414) target = $region60
        $region59: #{tpu_custom_call.1} parent=47 // pred_region
          %s417 = sadd.s32 %s29, 1
          %s418 = smul.u32 %s417, 2
          %p419 = scmp.lt.s32.totalorder %s418, 3
          %s420 = scalar_select %p419, %s418, 3
          %p421 = scmp.lt.s32.totalorder %s28, 1
          %s422 = scalar_select %p421, %s28, 1
          %p423 = scmp.lt.s32.totalorder %s420, 3
          %s424 = scalar_select %p423, %s420, 3
          %s425 = smul.addr %s422, 4
          %s426 = sadd.s32 %s424, %s425
          %s427 = smul.addr %s426, 4
          %s428 = scalar_lea.vmem %s2, %s427
          %s429 = sadd.s32 %s29, 1
          %s430 = smul.u32 %s429, 2
          %p431 = scmp.lt.s32.totalorder %s430, 3
          %s432 = scalar_select %p431, %s430, 3
        $region60: #{tpu_custom_call.1} parent=47 // pred_fallthru
          _
      $region48: #{tpu_custom_call.1} parent=5 // pred_fallthru
        _
      %p433 = scmp.le.s32.totalorder 1, %s21
      %p434 = scmp.lt.s32.totalorder %s21, 5
      %p435 = pnand %p433, %p434
      %p436 = pneg %p435
      // Predicated region
      $region61: #{tpu_custom_call.1} parent=5 // pred_check
        _
      $region62: #{tpu_custom_call.1} parent=5 // pred_check_branch
        %438 = sbr.rel (%p435) target = $region64
      $region63: #{tpu_custom_call.1} parent=5 // pred_region
        %s439 = ssub.s32 %s21, 1
        // Predicated region
        $region65: #{tpu_custom_call.1} parent=63 // pred_check
          %p440 = pneg %p196
        $region66: #{tpu_custom_call.1} parent=63 // pred_check_branch
          %442 = sbr.rel (%p440) target = $region68
        $region67: #{tpu_custom_call.1} parent=63 // pred_region
          %443 = dma.done [#allocation3], 3072
        $region68: #{tpu_custom_call.1} parent=63 // pred_fallthru
          _
        %s444 = smul.u32 2, %s31
        %p445 = scmp.lt.s32.totalorder %s30, 1
        %s446 = scalar_select %p445, %s30, 1
        %p447 = scmp.lt.s32.totalorder %s444, 3
        %s448 = scalar_select %p447, %s444, 3
        %s449 = smul.addr %s446, 4
        %s450 = sadd.s32 %s448, %s449
        %s451 = smul.addr %s450, 4
        %s452 = scalar_lea.vmem %s0, %s451
        %p453 = pneg %p61
        %p454 = pneg %p58
        %s455 = smul.u32 %s31, 2
        %s456 = ssub.s32 %s455, 1
        %p457 = scmp.gt.s32.totalorder %s456, 0
        %s458 = scalar_select %p457, %s456, 0
        %p459 = scmp.lt.s32.totalorder %s30, 1
        %s460 = scalar_select %p459, %s30, 1
        %p461 = scmp.lt.s32.totalorder %s458, 3
        %s462 = scalar_select %p461, %s458, 3
        %s463 = smul.addr %s460, 4
        %s464 = sadd.s32 %s462, %s463
        %s465 = smul.addr %s464, 4
        %s466 = scalar_lea.vmem %s1, %s465
        %p467 = pneg %p97
        %p468 = pneg %p94
        %s469 = sadd.s32 %s31, 1
        %s470 = smul.u32 %s469, 2
        %p471 = scmp.lt.s32.totalorder %s470, 3
        %s472 = scalar_select %p471, %s470, 3
        %p473 = scmp.lt.s32.totalorder %s30, 1
        %s474 = scalar_select %p473, %s30, 1
        %p475 = scmp.lt.s32.totalorder %s472, 3
        %s476 = scalar_select %p475, %s472, 3
        %s477 = smul.addr %s474, 4
        %s478 = sadd.s32 %s476, %s477
        %s479 = smul.addr %s478, 4
        %s480 = scalar_lea.vmem %s2, %s479
        %p481 = pneg %p133
        %p482 = pneg %p130
        %p483 = pneg %p154
        %p484 = pneg %p151
        %p485 = pneg %p175
        %p486 = pneg %p172
        %p487 = pneg %p196
        %p488 = pneg %p193
        %p489 = pneg %p217
        %p490 = pneg %p214
        %p491 = pneg %p238
        %p492 = pneg %p235
        %p493 = pneg %p259
        %p494 = pneg %p256
        %p495 = pneg %p280
        %p496 = pneg %p277
        %p497 = pneg %p301
        %p498 = pneg %p298
        %p499 = pneg %p329
        %p500 = pneg %p326
        %s501 = sand.u32 %s316, 1
        %s502 = scalar_lea.sflag [#allocation4], %s501
        %s503 = sand.u32 %s316, 1
        %s504 = smul.addr %s503, 8
        %s505 = scalar_lea.vmem [#allocation5], %s504
        %s506 = smul.u32 2, %s31
        %p507 = scmp.lt.s32.totalorder %s30, 1
        %s508 = scalar_select %p507, %s30, 1
        %p509 = scmp.lt.s32.totalorder %s506, 3
        %s510 = scalar_select %p509, %s506, 3
        %s511 = smul.addr %s508, 4
        %s512 = sadd.s32 %s510, %s511
        %s513 = smul.addr %s512, 4
        %s514 = scalar_lea.vmem %s0, %s513
        %s515 = smul.u32 2, %s31
        %s516 = smul.u32 %s31, 2
        %s517 = ssub.s32 %s516, 1
        %p518 = scmp.gt.s32.totalorder %s517, 0
        %s519 = scalar_select %p518, %s517, 0
        %p520 = scmp.lt.s32.totalorder %s30, 1
        %s521 = scalar_select %p520, %s30, 1
        %p522 = scmp.lt.s32.totalorder %s519, 3
        %s523 = scalar_select %p522, %s519, 3
        %s524 = smul.addr %s521, 4
        %s525 = sadd.s32 %s523, %s524
        %s526 = smul.addr %s525, 4
        %s527 = scalar_lea.vmem %s1, %s526
        %s528 = smul.u32 %s31, 2
        %s529 = ssub.s32 %s528, 1
        %p530 = scmp.gt.s32.totalorder %s529, 0
        %s531 = scalar_select %p530, %s529, 0
        %s532 = sadd.s32 %s31, 1
        %s533 = smul.u32 %s532, 2
        %p534 = scmp.lt.s32.totalorder %s533, 3
        %s535 = scalar_select %p534, %s533, 3
        %p536 = scmp.lt.s32.totalorder %s30, 1
        %s537 = scalar_select %p536, %s30, 1
        %p538 = scmp.lt.s32.totalorder %s535, 3
        %s539 = scalar_select %p538, %s535, 3
        %s540 = smul.addr %s537, 4
        %s541 = sadd.s32 %s539, %s540
        %s542 = smul.addr %s541, 4
        %s543 = scalar_lea.vmem %s2, %s542
        %s544 = sadd.s32 %s31, 1
        %s545 = smul.u32 %s544, 2
        %p546 = scmp.lt.s32.totalorder %s545, 3
        %s547 = scalar_select %p546, %s545, 3
        %s548 = smul.u32 2, %s31
        %p550 = scmp.eq.s32.totalorder %s31, 0
        %p551 = scmp.eq.s32.totalorder %s31, 1
        %v552 = vld [vmem:[%s514] sm:$0xf]
        %v553 = vld [vmem:[%s514 + $0x4] sm:$0xf]
        %v554 = vld [vmem:[%s3] sm:$0xf]
        %v555 = vld [vmem:[%s4] sm:$0x1]
        %v557 = vlaneseq
        %v558 = vshrl.u32 %v557, 7
        %v559 = vsub.s32 0, %v558
        %v560 = vrot.slane %v555, %v559
        %v564 = vunpack.c.l.b16 %v552
        %v565 = vunpack.c.l.b16 %v553
        %v566 = vpack.c.b16 %v565, %v564
        %vm567 = vcmask 64512
        %v569 = vsel %vm567, %v566, 0
        %vm571 = vcmask 1043456
        %v573 = vsel %vm571, %v554, 0
        %575 = vmatprep.subr.bf16.mxu0 0
        %576 = vmatpush1.bf16.msra.mxu0 %v573
        %577 = vmatprep.subr.bf16.mxu0 0
        %578 = vmatpush1.bf16.msra.mxu0 0
        %579 = vmatprep.subr.bf16.mxu0 0
        %580 = vmatpush1.bf16.msra.mxu0 0
        %581 = vmatprep.subr.bf16.mxu0 0
        %582 = vmatpush1.bf16.msra.mxu0 0
        %583 = vmatprep.subr.bf16.mxu0 0
        %584 = vmatpush1.bf16.msra.mxu0 0
        %585 = vmatprep.subr.bf16.mxu0 0
        %586 = vmatpush1.bf16.msra.mxu0 0
        %587 = vmatprep.subr.bf16.mxu0 0
        %588 = vmatpush1.bf16.msra.mxu0 0
        %589 = vmatprep.subr.bf16.mxu0 0
        %590 = vmatpush1.bf16.msra.mxu0 0
        %591 = vmatprep.subr.bf16.mxu0 0
        %592 = vmatpush1.bf16.msra.mxu0 0
        %593 = vmatprep.subr.bf16.mxu0 0
        %594 = vmatpush1.bf16.msra.mxu0 0
        %595 = vmatprep.subr.bf16.mxu0 0
        %596 = vmatpush1.bf16.msra.mxu0 0
        %597 = vmatprep.subr.bf16.mxu0 0
        %598 = vmatpush1.bf16.msra.mxu0 0
        %599 = vmatprep.subr.bf16.mxu0 0
        %600 = vmatpush1.bf16.msra.mxu0 0
        %601 = vmatprep.subr.bf16.mxu0 0
        %602 = vmatpush1.bf16.msra.mxu0 0
        %603 = vmatprep.subr.bf16.mxu0 0
        %604 = vmatpush1.bf16.msra.mxu0 0
        %605 = vmatprep.subr.bf16.mxu0 0
        %606 = vmatpush1.bf16.msra.mxu0 0
        %607 = vmatprep.mubr.bf16.mxu0 0
        %608 = vmatmul.mubr.bf16.gmra.mrb[0].mxu0 %v569
        %v609 = vpop.f32.mrb[0].mxu0
        %v610 = vadd.f32 %v560, %v609
        %v611 = vpop.f32.mrb[0].mxu0
        %v612 = vpop.f32.mrb[0].mxu0
        %v613 = vadd.f32 %v560, %v612
        %v614 = vpop.f32.mrb[0].mxu0
        %615 = vdwg.mxu0
        %v616 = vmax.f32 %v610, 0.0
        %v617 = vmax.f32 %v613, 0.0
        %v618 = vld [vmem:[%s527] sm:$0xf]
        %v619 = vld [vmem:[%s543] sm:$0xf]
        %v621 = vunpack.c.l.b16 %v619
        %v622 = vpack.c.b16 %v621, %v621
        %v625 = vsel %vm571, %v618, %v622
        %v626 = vsel %vm567, %v625, 0
        %628 = vmatprep.subr.bf16.mxu0 0
        %629 = vmatpush1.bf16.msra.mxu0 %v573
        %630 = vmatprep.subr.bf16.mxu0 0
        %631 = vmatpush1.bf16.msra.mxu0 0
        %632 = vmatprep.subr.bf16.mxu0 0
        %633 = vmatpush1.bf16.msra.mxu0 0
        %634 = vmatprep.subr.bf16.mxu0 0
        %635 = vmatpush1.bf16.msra.mxu0 0
        %636 = vmatprep.subr.bf16.mxu0 0
        %637 = vmatpush1.bf16.msra.mxu0 0
        %638 = vmatprep.subr.bf16.mxu0 0
        %639 = vmatpush1.bf16.msra.mxu0 0
        %640 = vmatprep.subr.bf16.mxu0 0
        %641 = vmatpush1.bf16.msra.mxu0 0
        %642 = vmatprep.subr.bf16.mxu0 0
        %643 = vmatpush1.bf16.msra.mxu0 0
        %644 = vmatprep.subr.bf16.mxu0 0
        %645 = vmatpush1.bf16.msra.mxu0 0
        %646 = vmatprep.subr.bf16.mxu0 0
        %647 = vmatpush1.bf16.msra.mxu0 0
        %648 = vmatprep.subr.bf16.mxu0 0
        %649 = vmatpush1.bf16.msra.mxu0 0
        %650 = vmatprep.subr.bf16.mxu0 0
        %651 = vmatpush1.bf16.msra.mxu0 0
        %652 = vmatprep.subr.bf16.mxu0 0
        %653 = vmatpush1.bf16.msra.mxu0 0
        %654 = vmatprep.subr.bf16.mxu0 0
        %655 = vmatpush1.bf16.msra.mxu0 0
        %656 = vmatprep.subr.bf16.mxu0 0
        %657 = vmatpush1.bf16.msra.mxu0 0
        %658 = vmatprep.subr.bf16.mxu0 0
        %659 = vmatpush1.bf16.msra.mxu0 0
        %660 = vmatprep.mubr.bf16.mxu0 0
        %661 = vmatmul.mubr.bf16.gmra.mrb[0].mxu0 %v626
        %v662 = vpop.f32.mrb[0].mxu0
        %v663 = vadd.f32 %v560, %v662
        %v664 = vpop.f32.mrb[0].mxu0
        %v665 = vpop.f32.mrb[0].mxu0
        %v666 = vadd.f32 %v560, %v665
        %v667 = vpop.f32.mrb[0].mxu0
        %668 = vdwg.mxu0
        %v669 = vmax.f32 %v663, 0.0
        %v670 = vmax.f32 %v666, 0.0
        %s671 = scalar_select %p550, 1, 0
        %v672 = vstv %s671
        %vm673 = vcmp.eq.s32.totalorder %v672, 1
        %v674 = vsel %vm673, 0.0, %v669
        %s675 = scalar_select %p551, 1, 0
        %v676 = vstv %s675
        %vm677 = vcmp.eq.s32.totalorder %v676, 1
        %v678 = vsel %vm677, 0.0, %v670
        %v679 = vlaneseq
        %v680 = vshrl.u32 %v679, 7
        %v681 = vadd.s32 %v680, 8
        %vm682 = vcmp.eq.s32.totalorder %v680, 0
        %vm683 = vcmp.eq.s32.totalorder %v681, 0
        %v684 = vrot.slane %v616, 7
        %v685 = vrot.slane %v617, 7
        %vm686 = vcmp.lt.s32.totalorder %v680, 1
        %v687 = vsel %vm686, %v684, %v685
        %v688 = vsel %vm686, %v685, %v684
        %v689 = vlaneseq
        %v690 = vshrl.u32 %v689, 7
        %v691 = vsub.s32 7, %v690
        %v692 = vrot.slane %v674, %v691
        %v693 = vsel %vm682, %v692, %v688
        %v694 = vsel %vm683, %v692, %v687
        %vm695 = vcmp.eq.s32.totalorder %v680, 15
        %vm696 = vcmp.eq.s32.totalorder %v681, 15
        %v697 = vrot.slane %v616, 1
        %v698 = vrot.slane %v617, 1
        %vm699 = vcmp.lt.s32.totalorder %v680, 7
        %v700 = vsel %vm699, %v697, %v698
        %v701 = vsel %vm699, %v698, %v697
        %v702 = vlaneseq
        %v703 = vshrl.u32 %v702, 7
        %v704 = vsub.s32 0, %v703
        %v705 = vrot.slane %v678, %v704
        %v706 = vsel %vm695, %v705, %v700
        %v707 = vsel %vm696, %v705, %v701
        %v708 = vpack.c.bf16 %v694, %v693
        %v709 = vpack.c.bf16 %v617, %v616
        %v710 = vpack.c.bf16 %v707, %v706
        %v711 = vld [vmem:[#allocation2] sm:$0xf]
        %v712 = vld [vmem:[#allocation2 + $0x4] sm:$0xf]
        %v713 = vld [vmem:[#allocation2 + $0x8] sm:$0xf]
        %v714 = vld [vmem:[#allocation2 + $0xc] sm:$0xf]
        %v715 = vld [vmem:[#allocation2 + $0x10] sm:$0xf]
        %v716 = vld [vmem:[#allocation2 + $0x14] sm:$0xf]
        %v717 = vld [vmem:[#allocation2 + $0x18] sm:$0xf]
        %v718 = vld [vmem:[#allocation2 + $0x1c] sm:$0xf]
        %v719 = vld [vmem:[#allocation2 + $0x20] sm:$0xf]
        %v720 = vld [vmem:[#allocation2 + $0x24] sm:$0xf]
        %v721 = vld [vmem:[#allocation2 + $0x28] sm:$0xf]
        %v722 = vld [vmem:[#allocation2 + $0x2c] sm:$0xf]
        %v723 = vld [vmem:[#allocation2 + $0x30] sm:$0xf]
        %v724 = vld [vmem:[#allocation2 + $0x34] sm:$0xf]
        %v725 = vld [vmem:[#allocation2 + $0x38] sm:$0xf]
        %v726 = vld [vmem:[#allocation2 + $0x3c] sm:$0xf]
        %v727 = vld [vmem:[#allocation2 + $0x40] sm:$0xf]
        %v728 = vld [vmem:[#allocation2 + $0x44] sm:$0xf]
        %v729 = vld [vmem:[#allocation2 + $0x48] sm:$0xf]
        %v730 = vld [vmem:[#allocation2 + $0x4c] sm:$0xf]
        %v731 = vld [vmem:[#allocation2 + $0x50] sm:$0xf]
        %v732 = vld [vmem:[#allocation2 + $0x54] sm:$0xf]
        %v733 = vld [vmem:[#allocation2 + $0x58] sm:$0xf]
        %v734 = vld [vmem:[#allocation2 + $0x5c] sm:$0xf]
        %v735 = vld [vmem:[#allocation2 + $0x60] sm:$0xf]
        %v736 = vld [vmem:[#allocation2 + $0x64] sm:$0xf]
        %v737 = vld [vmem:[#allocation2 + $0x68] sm:$0xf]
        %v738 = vld [vmem:[#allocation2 + $0x6c] sm:$0xf]
        %v739 = vld [vmem:[#allocation2 + $0x70] sm:$0xf]
        %v740 = vld [vmem:[#allocation2 + $0x74] sm:$0xf]
        %v741 = vld [vmem:[#allocation2 + $0x78] sm:$0xf]
        %v742 = vld [vmem:[#allocation2 + $0x7c] sm:$0xf]
        %v743 = vld [vmem:[#allocation2 + $0x80] sm:$0xf]
        %v744 = vld [vmem:[#allocation2 + $0x84] sm:$0xf]
        %v745 = vld [vmem:[#allocation2 + $0x88] sm:$0xf]
        %v746 = vld [vmem:[#allocation2 + $0x8c] sm:$0xf]
        %v747 = vld [vmem:[#allocation2 + $0x90] sm:$0xf]
        %v748 = vld [vmem:[#allocation2 + $0x94] sm:$0xf]
        %v749 = vld [vmem:[#allocation2 + $0x98] sm:$0xf]
        %v750 = vld [vmem:[#allocation2 + $0x9c] sm:$0xf]
        %v751 = vld [vmem:[#allocation2 + $0xa0] sm:$0xf]
        %v752 = vld [vmem:[#allocation2 + $0xa4] sm:$0xf]
        %v753 = vld [vmem:[#allocation2 + $0xa8] sm:$0xf]
        %v754 = vld [vmem:[#allocation2 + $0xac] sm:$0xf]
        %v755 = vld [vmem:[#allocation2 + $0xb0] sm:$0xf]
        %v756 = vld [vmem:[#allocation2 + $0xb4] sm:$0xf]
        %v757 = vld [vmem:[#allocation2 + $0xb8] sm:$0xf]
        %v758 = vld [vmem:[#allocation2 + $0xbc] sm:$0xf]
        %v759 = vld [vmem:[%s6] sm:$0x1]
        %v761 = vlaneseq
        %v762 = vshrl.u32 %v761, 7
        %v763 = vsub.s32 0, %v762
        %v764 = vrot.slane %v759, %v763
        %v814 = vunpack.c.l.b16 %v711
        %v815 = vunpack.c.l.b16 %v712
        %v816 = vunpack.c.l.b16 %v713
        %v817 = vunpack.c.l.b16 %v714
        %v818 = vunpack.c.l.b16 %v715
        %v819 = vunpack.c.l.b16 %v716
        %v820 = vunpack.c.l.b16 %v717
        %v821 = vunpack.c.l.b16 %v718
        %v822 = vunpack.c.l.b16 %v719
        %v823 = vunpack.c.l.b16 %v720
        %v824 = vunpack.c.l.b16 %v721
        %v825 = vunpack.c.l.b16 %v722
        %v826 = vunpack.c.l.b16 %v723
        %v827 = vunpack.c.l.b16 %v724
        %v828 = vunpack.c.l.b16 %v725
        %v829 = vunpack.c.l.b16 %v726
        %v830 = vunpack.c.l.b16 %v727
        %v831 = vunpack.c.l.b16 %v728
        %v832 = vunpack.c.l.b16 %v729
        %v833 = vunpack.c.l.b16 %v730
        %v834 = vunpack.c.l.b16 %v731
        %v835 = vunpack.c.l.b16 %v732
        %v836 = vunpack.c.l.b16 %v733
        %v837 = vunpack.c.l.b16 %v734
        %v838 = vunpack.c.l.b16 %v735
        %v839 = vunpack.c.l.b16 %v736
        %v840 = vunpack.c.l.b16 %v737
        %v841 = vunpack.c.l.b16 %v738
        %v842 = vunpack.c.l.b16 %v739
        %v843 = vunpack.c.l.b16 %v740
        %v844 = vunpack.c.l.b16 %v741
        %v845 = vunpack.c.l.b16 %v742
        %v846 = vunpack.c.l.b16 %v743
        %v847 = vunpack.c.l.b16 %v744
        %v848 = vunpack.c.l.b16 %v745
        %v849 = vunpack.c.l.b16 %v746
        %v850 = vunpack.c.l.b16 %v747
        %v851 = vunpack.c.l.b16 %v748
        %v852 = vunpack.c.l.b16 %v749
        %v853 = vunpack.c.l.b16 %v750
        %v854 = vunpack.c.l.b16 %v751
        %v855 = vunpack.c.l.b16 %v752
        %v856 = vunpack.c.l.b16 %v753
        %v857 = vunpack.c.l.b16 %v754
        %v858 = vunpack.c.l.b16 %v755
        %v859 = vunpack.c.l.b16 %v756
        %v860 = vunpack.c.l.b16 %v757
        %v861 = vunpack.c.l.b16 %v758
        %v862 = vpack.c.b16 %v815, %v814
        %v863 = vpack.c.b16 %v817, %v816
        %v864 = vpack.c.b16 %v819, %v818
        %v865 = vpack.c.b16 %v821, %v820
        %v866 = vpack.c.b16 %v823, %v822
        %v867 = vpack.c.b16 %v825, %v824
        %v868 = vpack.c.b16 %v827, %v826
        %v869 = vpack.c.b16 %v829, %v828
        %v870 = vpack.c.b16 %v831, %v830
        %v871 = vpack.c.b16 %v833, %v832
        %v872 = vpack.c.b16 %v835, %v834
        %v873 = vpack.c.b16 %v837, %v836
        %v874 = vpack.c.b16 %v839, %v838
        %v875 = vpack.c.b16 %v841, %v840
        %v876 = vpack.c.b16 %v843, %v842
        %v877 = vpack.c.b16 %v845, %v844
        %v878 = vpack.c.b16 %v847, %v846
        %v879 = vpack.c.b16 %v849, %v848
        %v880 = vpack.c.b16 %v851, %v850
        %v881 = vpack.c.b16 %v853, %v852
        %v882 = vpack.c.b16 %v855, %v854
        %v883 = vpack.c.b16 %v857, %v856
        %v884 = vpack.c.b16 %v859, %v858
        %v885 = vpack.c.b16 %v861, %v860
        %910 = vmatprep.subr.bf16.mxu0 0
        %911 = vmatpush1.bf16.msra.mxu0 %v862
        %912 = vmatprep.subr.bf16.mxu0 0
        %913 = vmatpush1.bf16.msra.mxu0 %v863
        %914 = vmatprep.subr.bf16.mxu0 0
        %915 = vmatpush1.bf16.msra.mxu0 %v864
        %916 = vmatprep.subr.bf16.mxu0 0
        %917 = vmatpush1.bf16.msra.mxu0 %v865
        %918 = vmatprep.subr.bf16.mxu0 0
        %919 = vmatpush1.bf16.msra.mxu0 %v866
        %920 = vmatprep.subr.bf16.mxu0 0
        %921 = vmatpush1.bf16.msra.mxu0 %v867
        %922 = vmatprep.subr.bf16.mxu0 0
        %923 = vmatpush1.bf16.msra.mxu0 %v868
        %924 = vmatprep.subr.bf16.mxu0 0
        %925 = vmatpush1.bf16.msra.mxu0 %v869
        %926 = vmatprep.subr.bf16.mxu0 0
        %927 = vmatpush1.bf16.msra.mxu0 %v870
        %928 = vmatprep.subr.bf16.mxu0 0
        %929 = vmatpush1.bf16.msra.mxu0 %v871
        %930 = vmatprep.subr.bf16.mxu0 0
        %931 = vmatpush1.bf16.msra.mxu0 %v872
        %932 = vmatprep.subr.bf16.mxu0 0
        %933 = vmatpush1.bf16.msra.mxu0 %v873
        %934 = vmatprep.subr.bf16.mxu0 0
        %935 = vmatpush1.bf16.msra.mxu0 %v874
        %936 = vmatprep.subr.bf16.mxu0 0
        %937 = vmatpush1.bf16.msra.mxu0 %v875
        %938 = vmatprep.subr.bf16.mxu0 0
        %939 = vmatpush1.bf16.msra.mxu0 %v876
        %940 = vmatprep.subr.bf16.mxu0 0
        %941 = vmatpush1.bf16.msra.mxu0 %v877
        %942 = vmatprep.mubr.bf16.mxu0 %v709
        %943 = vmatmul.mubr.bf16.gmra.mrb[0].mxu0 %v708
        %v944 = vpop.f32.mrb[0].mxu0
        %v945 = vadd.f32 %v764, %v944
        %v946 = vpop.f32.mrb[0].mxu0
        %v947 = vpop.f32.mrb[0].mxu0
        %v948 = vadd.f32 %v764, %v947
        %v949 = vpop.f32.mrb[0].mxu0
        %950 = vdwg.mxu0
        %951 = vmatprep.subr.bf16.mxu0 0
        %952 = vmatpush1.bf16.msra.mxu0 %v878
        %953 = vmatprep.subr.bf16.mxu0 0
        %954 = vmatpush1.bf16.msra.mxu0 %v879
        %955 = vmatprep.subr.bf16.mxu0 0
        %956 = vmatpush1.bf16.msra.mxu0 %v880
        %957 = vmatprep.subr.bf16.mxu0 0
        %958 = vmatpush1.bf16.msra.mxu0 %v881
        %959 = vmatprep.subr.bf16.mxu0 0
        %960 = vmatpush1.bf16.msra.mxu0 %v882
        %961 = vmatprep.subr.bf16.mxu0 0
        %962 = vmatpush1.bf16.msra.mxu0 %v883
        %963 = vmatprep.subr.bf16.mxu0 0
        %964 = vmatpush1.bf16.msra.mxu0 %v884
        %965 = vmatprep.subr.bf16.mxu0 0
        %966 = vmatpush1.bf16.msra.mxu0 %v885
        %967 = vmatprep.subr.bf16.mxu0 0
        %968 = vmatpush1.bf16.msra.mxu0 0
        %969 = vmatprep.subr.bf16.mxu0 0
        %970 = vmatpush1.bf16.msra.mxu0 0
        %971 = vmatprep.subr.bf16.mxu0 0
        %972 = vmatpush1.bf16.msra.mxu0 0
        %973 = vmatprep.subr.bf16.mxu0 0
        %974 = vmatpush1.bf16.msra.mxu0 0
        %975 = vmatprep.subr.bf16.mxu0 0
        %976 = vmatpush1.bf16.msra.mxu0 0
        %977 = vmatprep.subr.bf16.mxu0 0
        %978 = vmatpush1.bf16.msra.mxu0 0
        %979 = vmatprep.subr.bf16.mxu0 0
        %980 = vmatpush1.bf16.msra.mxu0 0
        %981 = vmatprep.subr.bf16.mxu0 0
        %982 = vmatpush1.bf16.msra.mxu0 0
        %983 = vmatprep.mubr.bf16.mxu0 0
        %984 = vmatmul.mubr.bf16.gmra.mrb[0].mxu0 %v710
        %v985 = vpop.f32.mrb[0].mxu0
        %v986 = vadd.f32 %v945, %v985
        %v987 = vpop.f32.mrb[0].mxu0
        %v988 = vpop.f32.mrb[0].mxu0
        %v989 = vadd.f32 %v948, %v988
        %v990 = vpop.f32.mrb[0].mxu0
        %991 = vdwg.mxu0
        %v992 = vmax.f32 %v986, 0.0
        %v993 = vmax.f32 %v989, 0.0
        %v994 = vpack.c.bf16 %v993, %v992
        %v995 = vld [vmem:[%s7] sm:$0xf]
        %v996 = vld [vmem:[%s7 + $0x4] sm:$0xf]
        %v997 = vld [vmem:[%s7 + $0x8] sm:$0xf]
        %v998 = vld [vmem:[%s7 + $0xc] sm:$0xf]
        %v999 = vld [vmem:[%s7 + $0x10] sm:$0xf]
        %v1000 = vld [vmem:[%s7 + $0x14] sm:$0xf]
        %v1001 = vld [vmem:[%s7 + $0x18] sm:$0xf]
        %v1002 = vld [vmem:[%s7 + $0x1c] sm:$0xf]
        %v1003 = vld [vmem:[%s7 + $0x20] sm:$0xf]
        %v1004 = vld [vmem:[%s7 + $0x24] sm:$0xf]
        %v1005 = vld [vmem:[%s7 + $0x28] sm:$0xf]
        %v1006 = vld [vmem:[%s7 + $0x2c] sm:$0xf]
        %v1007 = vld [vmem:[%s7 + $0x30] sm:$0xf]
        %v1008 = vld [vmem:[%s7 + $0x34] sm:$0xf]
        %v1009 = vld [vmem:[%s7 + $0x38] sm:$0xf]
        %v1010 = vld [vmem:[%s7 + $0x3c] sm:$0xf]
        %v1011 = vld [vmem:[%s8] sm:$0x1]
        %v1013 = vlaneseq
        %v1014 = vshrl.u32 %v1013, 7
        %v1015 = vsub.s32 0, %v1014
        %v1016 = vrot.slane %v1011, %v1015
        %v1034 = vunpack.c.l.b16 %v995
        %v1035 = vunpack.c.l.b16 %v996
        %v1036 = vunpack.c.l.b16 %v997
        %v1037 = vunpack.c.l.b16 %v998
        %v1038 = vunpack.c.l.b16 %v999
        %v1039 = vunpack.c.l.b16 %v1000
        %v1040 = vunpack.c.l.b16 %v1001
        %v1041 = vunpack.c.l.b16 %v1002
        %v1042 = vunpack.c.l.b16 %v1003
        %v1043 = vunpack.c.l.b16 %v1004
        %v1044 = vunpack.c.l.b16 %v1005
        %v1045 = vunpack.c.l.b16 %v1006
        %v1046 = vunpack.c.l.b16 %v1007
        %v1047 = vunpack.c.l.b16 %v1008
        %v1048 = vunpack.c.l.b16 %v1009
        %v1049 = vunpack.c.l.b16 %v1010
        %v1050 = vpack.c.b16 %v1035, %v1034
        %v1051 = vpack.c.b16 %v1037, %v1036
        %v1052 = vpack.c.b16 %v1039, %v1038
        %v1053 = vpack.c.b16 %v1041, %v1040
        %v1054 = vpack.c.b16 %v1043, %v1042
        %v1055 = vpack.c.b16 %v1045, %v1044
        %v1056 = vpack.c.b16 %v1047, %v1046
        %v1057 = vpack.c.b16 %v1049, %v1048
        %1066 = vmatprep.subr.bf16.mxu0 0
        %1067 = vmatpush1.bf16.msra.mxu0 %v1050
        %1068 = vmatprep.subr.bf16.mxu0 0
        %1069 = vmatpush1.bf16.msra.mxu0 %v1051
        %1070 = vmatprep.subr.bf16.mxu0 0
        %1071 = vmatpush1.bf16.msra.mxu0 %v1052
        %1072 = vmatprep.subr.bf16.mxu0 0
        %1073 = vmatpush1.bf16.msra.mxu0 %v1053
        %1074 = vmatprep.subr.bf16.mxu0 0
        %1075 = vmatpush1.bf16.msra.mxu0 %v1054
        %1076 = vmatprep.subr.bf16.mxu0 0
        %1077 = vmatpush1.bf16.msra.mxu0 %v1055
        %1078 = vmatprep.subr.bf16.mxu0 0
        %1079 = vmatpush1.bf16.msra.mxu0 %v1056
        %1080 = vmatprep.subr.bf16.mxu0 0
        %1081 = vmatpush1.bf16.msra.mxu0 %v1057
        %1082 = vmatprep.subr.bf16.mxu0 0
        %1083 = vmatpush1.bf16.msra.mxu0 0
        %1084 = vmatprep.subr.bf16.mxu0 0
        %1085 = vmatpush1.bf16.msra.mxu0 0
        %1086 = vmatprep.subr.bf16.mxu0 0
        %1087 = vmatpush1.bf16.msra.mxu0 0
        %1088 = vmatprep.subr.bf16.mxu0 0
        %1089 = vmatpush1.bf16.msra.mxu0 0
        %1090 = vmatprep.subr.bf16.mxu0 0
        %1091 = vmatpush1.bf16.msra.mxu0 0
        %1092 = vmatprep.subr.bf16.mxu0 0
        %1093 = vmatpush1.bf16.msra.mxu0 0
        %1094 = vmatprep.subr.bf16.mxu0 0
        %1095 = vmatpush1.bf16.msra.mxu0 0
        %1096 = vmatprep.subr.bf16.mxu0 0
        %1097 = vmatpush1.bf16.msra.mxu0 0
        %1098 = vmatprep.mubr.bf16.mxu0 0
        %1099 = vmatmul.mubr.bf16.gmra.mrb[0].mxu0 %v994
        %v1100 = vpop.f32.mrb[0].mxu0
        %v1101 = vadd.f32 %v1016, %v1100
        %v1102 = vpop.f32.mrb[0].mxu0
        %v1103 = vpop.f32.mrb[0].mxu0
        %v1104 = vadd.f32 %v1016, %v1103
        %v1105 = vpop.f32.mrb[0].mxu0
        %1106 = vdwg.mxu0
        %v1107 = vmax.f32 %v1101, 0.0
        %v1108 = vmax.f32 %v1104, 0.0
        %v1109 = vld [vmem:[%s9] sm:$0xf]
        %v1110 = vld [vmem:[%s10] sm:$0x1]
        %v1112 = vlaneseq
        %v1113 = vshrl.u32 %v1112, 7
        %v1114 = vsub.s32 0, %v1113
        %v1115 = vrot.slane %v1110, %v1114
        %v1118 = vsel %vm571, %v1109, 0
        %1120 = vmatprep.subr.bf16.mxu0 0
        %1121 = vmatpush1.bf16.msra.mxu0 %v1118
        %1122 = vmatprep.subr.bf16.mxu0 0
        %1123 = vmatpush1.bf16.msra.mxu0 0
        %1124 = vmatprep.subr.bf16.mxu0 0
        %1125 = vmatpush1.bf16.msra.mxu0 0
        %1126 = vmatprep.subr.bf16.mxu0 0
        %1127 = vmatpush1.bf16.msra.mxu0 0
        %1128 = vmatprep.subr.bf16.mxu0 0
        %1129 = vmatpush1.bf16.msra.mxu0 0
        %1130 = vmatprep.subr.bf16.mxu0 0
        %1131 = vmatpush1.bf16.msra.mxu0 0
        %1132 = vmatprep.subr.bf16.mxu0 0
        %1133 = vmatpush1.bf16.msra.mxu0 0
        %1134 = vmatprep.subr.bf16.mxu0 0
        %1135 = vmatpush1.bf16.msra.mxu0 0
        %1136 = vmatprep.subr.bf16.mxu0 0
        %1137 = vmatpush1.bf16.msra.mxu0 0
        %1138 = vmatprep.subr.bf16.mxu0 0
        %1139 = vmatpush1.bf16.msra.mxu0 0
        %1140 = vmatprep.subr.bf16.mxu0 0
        %1141 = vmatpush1.bf16.msra.mxu0 0
        %1142 = vmatprep.subr.bf16.mxu0 0
        %1143 = vmatpush1.bf16.msra.mxu0 0
        %1144 = vmatprep.subr.bf16.mxu0 0
        %1145 = vmatpush1.bf16.msra.mxu0 0
        %1146 = vmatprep.subr.bf16.mxu0 0
        %1147 = vmatpush1.bf16.msra.mxu0 0
        %1148 = vmatprep.subr.bf16.mxu0 0
        %1149 = vmatpush1.bf16.msra.mxu0 0
        %1150 = vmatprep.subr.bf16.mxu0 0
        %1151 = vmatpush1.bf16.msra.mxu0 0
        %1152 = vmatprep.mubr.bf16.mxu0 0
        %1153 = vmatmul.mubr.bf16.gmra.mrb[0].mxu0 %v569
        %v1154 = vpop.f32.mrb[0].mxu0
        %v1155 = vadd.f32 %v1115, %v1154
        %v1156 = vpop.f32.mrb[0].mxu0
        %v1157 = vpop.f32.mrb[0].mxu0
        %v1158 = vadd.f32 %v1115, %v1157
        %v1159 = vpop.f32.mrb[0].mxu0
        %1160 = vdwg.mxu0
        %v1161 = vadd.f32 %v1107, %v1155
        %v1162 = vadd.f32 %v1108, %v1158
        %v1163 = vmax.f32 %v1161, 0.0
        %v1164 = vmax.f32 %v1162, 0.0
        %v1165 = vpack.c.bf16 %v1164, %v1163
        %v1167 = vunpack.c.l.b16 %v1165
        %v1168 = vunpack.c.h.b16 %v1165
        %v1169 = vpack.c.b16 %v1167, %v1167
        %v1170 = vpack.c.b16 %v1168, %v1168
        %1173 = vst [vmem:[%s505] sm:$0xf] %v1169
        %1174 = vst [vmem:[%s505 + $0x4] sm:$0xf] %v1170
        %s1175 = sand.u32 %s316, 1
        %s1176 = scalar_lea.sflag [#allocation4], %s1175
        %s1177 = sand.u32 %s316, 1
        %s1178 = smul.addr %s1177, 8
        %s1179 = scalar_lea.vmem [#allocation5], %s1178
        // Predicated region
        $region69: #{tpu_custom_call.1} parent=63 // pred_check
          %p1180 = pneg %p326
        $region70: #{tpu_custom_call.1} parent=63 // pred_check_branch
          %1182 = sbr.rel (%p1180) target = $region72
        $region71: #{tpu_custom_call.1} parent=63 // pred_region
          %s1183 = smul.u32 2, %s31
          %s1185 = ssub.s32 128, 128
          %1186 = vsyncadd %s1176, %s1185
          %s1187 = smul.addr %s30, 4
          %s1188 = sadd.s32 %s1183, %s1187
          %s1189 = smul.addr %s1188, 64
          %s1190 = scalar_lea.hbm %s11, %s1189
          %s1191 = sshll.u32 %s1179, 4
          %s1192 = int_to_ptr.vmem [resolvable:$true] %s1191
          %1197 = dma.vmem_to_hbm [thread:$0]  %s1192, 128, %s1190, %s1176, 64, 64, 4
        $region72: #{tpu_custom_call.1} parent=63 // pred_fallthru
          _
      $region64: #{tpu_custom_call.1} parent=5 // pred_fallthru
        _
      %p1198 = scmp.le.s32.totalorder 2, %s21
      // Predicated region
      $region73: #{tpu_custom_call.1} parent=5 // pred_check
        %p1199 = pneg %p1198
      $region74: #{tpu_custom_call.1} parent=5 // pred_check_branch
        %1201 = sbr.rel (%p1199) target = $region76
      $region75: #{tpu_custom_call.1} parent=5 // pred_region
        %s1202 = ssub.s32 %s21, 2
        // Predicated region
        $region77: #{tpu_custom_call.1} parent=75 // pred_check
          %p1203 = pneg %p332
        $region78: #{tpu_custom_call.1} parent=75 // pred_check_branch
          %1205 = sbr.rel (%p1203) target = $region80
        $region79: #{tpu_custom_call.1} parent=75 // pred_region
          %s1206 = sand.u32 %s317, 1
          %s1207 = scalar_lea.sflag [#allocation4], %s1206
          %s1208 = sand.u32 %s317, 1
          %s1209 = smul.addr %s1208, 8
          %s1210 = scalar_lea.vmem [#allocation5], %s1209
          %1211 = dma.done %s1207, 128
        $region80: #{tpu_custom_call.1} parent=75 // pred_fallthru
          _
      $region76: #{tpu_custom_call.1} parent=5 // pred_fallthru
        _
    $region6: #{tpu_custom_call.1} parent=1 // loop_footer
      %s25 = sadd.s32 1, %s21
    $region7: #{tpu_custom_call.1} parent=1 // loop_footer_branch
      %20 = sbr.rel target = $region3
    $region8: #{tpu_custom_call.1} parent=1 // loop_exit
      _
    %1212 = vsyncpa [#allocation3], 1
    %s1213 = scalar_lea.sflag [#allocation3], 1
    %1214 = vsyncpa %s1213, 1
    %1215 = vsyncpa [#allocation4], 1
    %s1216 = scalar_lea.sflag [#allocation4], 1
    %1217 = vsyncpa %s1216, 1

</llo_original>
